<compile_context>
chip_gen: v7x
topology: tpu7x:2x2x1
jax: 0.10.0
libtpu: 0.0.40
codegen_flags: <defaults>
</compile_context>

<pallas_src>
import jax
import jax.numpy as jnp
import numpy as np
from jax.experimental import pallas as pl
from jax.experimental.pallas import tpu as pltpu


def _round_up(x, m):
    return (x + m - 1) // m * m


# ---------------------------------------------------------------------------
# Kernel
# ---------------------------------------------------------------------------
def encoder_lstm_kernel(
    x_ref, h0_ref, c0_ref,
    w1_ref, b1_ref, w2_ref, b2_ref, w3_ref, b3_ref,
    wih_ref, whh_ref, bg_ref,
    hn_ref, cn_ref,
):
    """One batch tile of: Linear-ReLU-Linear-ReLU-Linear -> single LSTM step.

    Gate biases are pre-summed and the sigmoid gates (i, f, o) pre-scaled by
    0.5 at prep time, so a single jnp.tanh over the (TB, 4*H) gate slab plus a
    VPU fixup implements all four gate activations.
    """
    x = x_ref[...]
    h0 = h0_ref[...]
    c0 = c0_ref[...]

    # ---- linear_obs_rep: Linear -> ReLU -> Linear -> ReLU -> Linear --------
    z = jnp.maximum(
        jnp.dot(x, w1_ref[...], preferred_element_type=jnp.float32) + b1_ref[...], 0.0)
    z = jnp.maximum(
        jnp.dot(z, w2_ref[...], preferred_element_type=jnp.float32) + b2_ref[...], 0.0)
    n = jnp.dot(z, w3_ref[...], preferred_element_type=jnp.float32) + b3_ref[...]

    # ---- single LSTM step (seq_len == 1), PyTorch gate order [i, f, g, o] --
    # Two accumulating MXU dots (no concat => no vreg-tile relayout).
    gates = (jnp.dot(n, wih_ref[...], preferred_element_type=jnp.float32)
             + jnp.dot(h0, whh_ref[...], preferred_element_type=jnp.float32)
             + bg_ref[...])

    # i/f/o columns were pre-scaled by 0.5, so tanh(gates) gives tanh(x/2)
    # there and sigmoid(x) = 0.5*tanh(x/2) + 0.5 is a cheap VPU fixup.
    t = jnp.tanh(gates)
    H = hn_ref.shape[-1]
    i_g = 0.5 * t[:, 0 * H:1 * H] + 0.5
    f_g = 0.5 * t[:, 1 * H:2 * H] + 0.5
    g_g = t[:, 2 * H:3 * H]
    o_g = 0.5 * t[:, 3 * H:4 * H] + 0.5

    c_new = f_g * c0 + i_g * g_g
    h_new = o_g * jnp.tanh(c_new)

    hn_ref[...] = h_new
    cn_ref[...] = c_new


# ---------------------------------------------------------------------------
# Wrapper
# ---------------------------------------------------------------------------
def _pick_batch_tile(B):
    """Batch tile: large (HBM-roofline friendly) but >= 2 grid steps when the
    batch is big enough to split, so v7x's 2nd TensorCore gets work."""
    TB = min(1024, _round_up(B, 8))
    if B >= 16 and pl.cdiv(B, TB) < 2:
        TB = _round_up(pl.cdiv(B, 2), 8)
    return TB


@jax.jit
def encoder_lstm_forward(x, c1, c2, kernel_params):
    """Pallas EncoderLSTM.forward -> (ag_reps, h_n, c_n), each (B, rep_size).

    `kernel_params` must come from `prepare_params`.
    """
    B, in_dim = x.shape
    H = c1.shape[-1]
    w1, b1, w2, b2, w3, b3, wih, whh, bg = kernel_params

    TB = _pick_batch_tile(B)
    grid = (pl.cdiv(B, TB),)   # partial last tile OK: computation is per-row

    def act_spec(feat):
        return pl.BlockSpec((TB, feat), lambda i: (i, 0))

    def w_spec(a):             # weights/biases stay VMEM-resident across grid
        return pl.BlockSpec(a.shape, lambda i: (0, 0))

    h_out, c_out = pl.pallas_call(
        encoder_lstm_kernel,
        out_shape=(
            jax.ShapeDtypeStruct((B, H), jnp.float32),
            jax.ShapeDtypeStruct((B, H), jnp.float32),
        ),
        grid=grid,
        in_specs=[
            act_spec(in_dim), act_spec(H), act_spec(H),
            w_spec(w1), w_spec(b1), w_spec(w2), w_spec(b2),
            w_spec(w3), w_spec(b3), w_spec(wih), w_spec(whh), w_spec(bg),
        ],
        out_specs=(act_spec(H), act_spec(H)),
        compiler_params=pltpu.CompilerParams(
            dimension_semantics=("parallel",)),
    )(x.astype(jnp.float32), c1.astype(jnp.float32), c2.astype(jnp.float32),
      w1, b1, w2, b2, w3, b3, wih, whh, bg)

    # seq_len == 1  =>  ag_reps.squeeze(0) == h_n : single write, aliased here.
    return h_out, h_out, c_out


# ---------------------------------------------------------------------------
# Parameter prep (mid padding + bias fusion + sigmoid half-fold) — once, no jit
# ---------------------------------------------------------------------------
def prepare_params(torch_layout_params, mid_dim1, rep_size):
    """PyTorch-layout params -> kernel layout.

    Expects Linear weights already transposed to (in, out) and LSTM weights as
    W_ih (mid, 4*rep), W_hh (rep, 4*rep), gate order [i, f, g, o].
    """
    (w1, b1, w2, b2, w3, b3, wih, bih, whh, bhh) = [
        np.asarray(p, np.float32) for p in torch_layout_params]
    H = rep_size
    MP = _round_up(mid_dim1, 128)
    in_dim = w1.shape[0]

    # Zero-pad mid_dim1 -> MP (lane-dense MLP; pad lanes are 0 end-to-end).
    w1p = np.zeros((in_dim, MP), np.float32); w1p[:, :mid_dim1] = w1
    b1p = np.zeros((1, MP), np.float32);      b1p[:, :mid_dim1] = b1
    w2p = np.zeros((MP, MP), np.float32);     w2p[:mid_dim1, :mid_dim1] = w2
    b2p = np.zeros((1, MP), np.float32);      b2p[:, :mid_dim1] = b2
    w3p = np.zeros((MP, MP), np.float32);     w3p[:mid_dim1, :mid_dim1] = w3
    b3p = np.zeros((1, MP), np.float32);      b3p[:, :mid_dim1] = b3

    # Gate params: biases pre-summed; i/f/o columns pre-scaled by 0.5 so the
    # kernel's single tanh implements the sigmoids (g gate left unscaled).
    scale = np.ones((1, 4 * H), np.float32)
    scale[:, 0 * H:2 * H] = 0.5          # i, f
    scale[:, 3 * H:4 * H] = 0.5          # o

    wihp = np.zeros((MP, 4 * H), np.float32)
    wihp[:mid_dim1, :] = wih
    wihp *= scale
    whhp = whh * scale
    bgp = (bih + bhh) * scale

    return tuple(jnp.asarray(a, jnp.float32)
                 for a in (w1p, b1p, w2p, b2p, w3p, b3p, wihp, whhp, bgp))


# ---------------------------------------------------------------------------
# PyTorch-style init + pure-JAX reference
# ---------------------------------------------------------------------------
def init_params(key, in_dim, mid_dim1, rep_size):
    """Deterministic uniform init (PyTorch-style bound = 1/sqrt(fan_in))."""
    ks = jax.random.split(key, 10)

    def u(k, shape, bound):
        return jax.random.uniform(k, shape, jnp.float32, -bound, bound)

    b_lin1 = 1.0 / np.sqrt(in_dim)
    b_lin2 = 1.0 / np.sqrt(mid_dim1)
    b_lstm = 1.0 / np.sqrt(rep_size)

    w1 = u(ks[0], (in_dim, mid_dim1), b_lin1)
    b1 = u(ks[1], (1, mid_dim1), b_lin1)
    w2 = u(ks[2], (mid_dim1, mid_dim1), b_lin2)
    b2 = u(ks[3], (1, mid_dim1), b_lin2)
    w3 = u(ks[4], (mid_dim1, mid_dim1), b_lin2)
    b3 = u(ks[5], (1, mid_dim1), b_lin2)
    wih = u(ks[6], (mid_dim1, 4 * rep_size), b_lstm)
    bih = u(ks[7], (1, 4 * rep_size), b_lstm)
    whh = u(ks[8], (rep_size, 4 * rep_size), b_lstm)
    bhh = u(ks[9], (1, 4 * rep_size), b_lstm)
    return (w1, b1, w2, b2, w3, b3, wih, bih, whh, bhh)


def reference_forward(x, c1, c2, params, rep_size):
    """Pure-JAX reference of EncoderLSTM.forward for validation."""
    w1, b1, w2, b2, w3, b3, wih, bih, whh, bhh = params
    z = jnp.maximum(x @ w1 + b1, 0.0)
    z = jnp.maximum(z @ w2 + b2, 0.0)
    n = z @ w3 + b3
    gates = n @ wih + bih + c1 @ whh + bhh
    H = rep_size
    i = jax.nn.sigmoid(gates[:, 0 * H:1 * H])
    f = jax.nn.sigmoid(gates[:, 1 * H:2 * H])
    g = jnp.tanh(gates[:, 2 * H:3 * H])
    o = jax.nn.sigmoid(gates[:, 3 * H:4 * H])
    c_new = f * c2 + i * g
    h_new = o * jnp.tanh(c_new)
    return h_new, h_new, c_new


if __name__ == "__main__":
    # Small, forward-consistent shapes.
    B = 8
    obs_dim, obs_u_dim = 12, 4
    mid_dim1, rep_size = 32, 32
    in_dim = obs_dim + obs_u_dim

    key = jax.random.PRNGKey(0)
    k_x, k_c1, k_c2, k_p = jax.random.split(key, 4)

    x = jax.random.normal(k_x, (B, in_dim), jnp.float32)
    c1 = jax.random.normal(k_c1, (B, rep_size), jnp.float32)   # h0
    c2 = jax.random.normal(k_c2, (B, rep_size), jnp.float32)   # c0

    torch_params = init_params(k_p, in_dim, mid_dim1, rep_size)
    kernel_params = prepare_params(torch_params, mid_dim1, rep_size)

    ag_reps, h_n, c_n = encoder_lstm_forward(x, c1, c2, kernel_params)
    jax.block_until_ready((ag_reps, h_n, c_n))

    ag_ref, h_ref, c_ref = reference_forward(x, c1, c2, torch_params, rep_size)
    np.testing.assert_allclose(np.asarray(ag_reps), np.asarray(ag_ref), rtol=1e-5, atol=1e-5)
    np.testing.assert_allclose(np.asarray(h_n), np.asarray(h_ref), rtol=1e-5, atol=1e-5)
    np.testing.assert_allclose(np.asarray(c_n), np.asarray(c_ref), rtol=1e-5, atol=1e-5)

    print("KERNEL_OK")
</pallas_src>

<mosaic_0001>
module attributes {stable_mosaic.version = 11 : i64} {
  func.func @encoder_lstm_kernel(%arg0: i32, %arg1: memref<8x16xf32, #tpu.memory_space<vmem>>, %arg2: memref<8x32xf32, #tpu.memory_space<vmem>>, %arg3: memref<8x32xf32, #tpu.memory_space<vmem>>, %arg4: memref<16x128xf32, #tpu.memory_space<vmem>>, %arg5: memref<1x128xf32, #tpu.memory_space<vmem>>, %arg6: memref<128x128xf32, #tpu.memory_space<vmem>>, %arg7: memref<1x128xf32, #tpu.memory_space<vmem>>, %arg8: memref<128x128xf32, #tpu.memory_space<vmem>>, %arg9: memref<1x128xf32, #tpu.memory_space<vmem>>, %arg10: memref<128x128xf32, #tpu.memory_space<vmem>>, %arg11: memref<32x128xf32, #tpu.memory_space<vmem>>, %arg12: memref<1x128xf32, #tpu.memory_space<vmem>>, %arg13: memref<8x32xf32, #tpu.memory_space<vmem>>, %arg14: memref<8x32xf32, #tpu.memory_space<vmem>>) attributes {dimension_semantics = [#tpu.dimension_semantics<parallel>], iteration_bounds = array<i64: 1>, scalar_prefetch = 0 : i64, scratch_operands = 0 : i64, tpu.core_type = #tpu.core_type<tc>, window_params = [{transform_indices = @transform_0, window_bounds = array<i64: 8, 16>}, {transform_indices = @transform_1, window_bounds = array<i64: 8, 32>}, {transform_indices = @transform_2, window_bounds = array<i64: 8, 32>}, {pipeline_mode = #tpu.pipeline_mode<synchronous>, transform_indices = @transform_3, window_bounds = array<i64: 16, 128>}, {pipeline_mode = #tpu.pipeline_mode<synchronous>, transform_indices = @transform_4, window_bounds = array<i64: 1, 128>}, {pipeline_mode = #tpu.pipeline_mode<synchronous>, transform_indices = @transform_5, window_bounds = array<i64: 128, 128>}, {pipeline_mode = #tpu.pipeline_mode<synchronous>, transform_indices = @transform_6, window_bounds = array<i64: 1, 128>}, {pipeline_mode = #tpu.pipeline_mode<synchronous>, transform_indices = @transform_7, window_bounds = array<i64: 128, 128>}, {pipeline_mode = #tpu.pipeline_mode<synchronous>, transform_indices = @transform_8, window_bounds = array<i64: 1, 128>}, {pipeline_mode = #tpu.pipeline_mode<synchronous>, transform_indices = @transform_9, window_bounds = array<i64: 128, 128>}, {pipeline_mode = #tpu.pipeline_mode<synchronous>, transform_indices = @transform_10, window_bounds = array<i64: 32, 128>}, {pipeline_mode = #tpu.pipeline_mode<synchronous>, transform_indices = @transform_11, window_bounds = array<i64: 1, 128>}, {transform_indices = @transform_12, window_bounds = array<i64: 8, 32>}, {transform_indices = @transform_13, window_bounds = array<i64: 8, 32>}]} {
    %c0 = arith.constant 0 : index
    %c0_0 = arith.constant 0 : index
    %0 = vector.load %arg1[%c0, %c0_0] : memref<8x16xf32, #tpu.memory_space<vmem>>, vector<8x16xf32>
    %c0_1 = arith.constant 0 : index
    %c0_2 = arith.constant 0 : index
    %1 = vector.load %arg2[%c0_1, %c0_2] : memref<8x32xf32, #tpu.memory_space<vmem>>, vector<8x32xf32>
    %c0_3 = arith.constant 0 : index
    %c0_4 = arith.constant 0 : index
    %2 = vector.load %arg3[%c0_3, %c0_4] : memref<8x32xf32, #tpu.memory_space<vmem>>, vector<8x32xf32>
    %c0_5 = arith.constant 0 : index
    %c0_6 = arith.constant 0 : index
    %3 = vector.load %arg4[%c0_5, %c0_6] : memref<16x128xf32, #tpu.memory_space<vmem>>, vector<16x128xf32>
    %cst = arith.constant dense<0.000000e+00> : vector<8x128xf32>
    %4 = tpu.matmul %0, %3, %cst {dimension_numbers = #tpu.dot_dimension_numbers<[1], [0], [0], [1], [0, 0, 1, 1], [], []>} : vector<8x16xf32>, vector<16x128xf32>, vector<8x128xf32> -> vector<8x128xf32>
    %c0_7 = arith.constant 0 : index
    %c0_8 = arith.constant 0 : index
    %5 = vector.load %arg5[%c0_7, %c0_8] : memref<1x128xf32, #tpu.memory_space<vmem>>, vector<1x128xf32>
    %6 = vector.broadcast %5 : vector<1x128xf32> to vector<8x128xf32>
    %7 = arith.addf %4, %6 : vector<8x128xf32>
    %cst_9 = arith.constant 0.000000e+00 : f32
    %8 = vector.broadcast %cst_9 : f32 to vector<8x128xf32>
    %9 = arith.maximumf %7, %8 : vector<8x128xf32>
    %c0_10 = arith.constant 0 : index
    %c0_11 = arith.constant 0 : index
    %10 = vector.load %arg6[%c0_10, %c0_11] : memref<128x128xf32, #tpu.memory_space<vmem>>, vector<128x128xf32>
    %cst_12 = arith.constant dense<0.000000e+00> : vector<8x128xf32>
    %11 = tpu.matmul %9, %10, %cst_12 {dimension_numbers = #tpu.dot_dimension_numbers<[1], [0], [0], [1], [0, 0, 1, 1], [], []>} : vector<8x128xf32>, vector<128x128xf32>, vector<8x128xf32> -> vector<8x128xf32>
    %c0_13 = arith.constant 0 : index
    %c0_14 = arith.constant 0 : index
    %12 = vector.load %arg7[%c0_13, %c0_14] : memref<1x128xf32, #tpu.memory_space<vmem>>, vector<1x128xf32>
    %13 = vector.broadcast %12 : vector<1x128xf32> to vector<8x128xf32>
    %14 = arith.addf %11, %13 : vector<8x128xf32>
    %cst_15 = arith.constant 0.000000e+00 : f32
    %15 = vector.broadcast %cst_15 : f32 to vector<8x128xf32>
    %16 = arith.maximumf %14, %15 : vector<8x128xf32>
    %c0_16 = arith.constant 0 : index
    %c0_17 = arith.constant 0 : index
    %17 = vector.load %arg8[%c0_16, %c0_17] : memref<128x128xf32, #tpu.memory_space<vmem>>, vector<128x128xf32>
    %cst_18 = arith.constant dense<0.000000e+00> : vector<8x128xf32>
    %18 = tpu.matmul %16, %17, %cst_18 {dimension_numbers = #tpu.dot_dimension_numbers<[1], [0], [0], [1], [0, 0, 1, 1], [], []>} : vector<8x128xf32>, vector<128x128xf32>, vector<8x128xf32> -> vector<8x128xf32>
    %c0_19 = arith.constant 0 : index
    %c0_20 = arith.constant 0 : index
    %19 = vector.load %arg9[%c0_19, %c0_20] : memref<1x128xf32, #tpu.memory_space<vmem>>, vector<1x128xf32>
    %20 = vector.broadcast %19 : vector<1x128xf32> to vector<8x128xf32>
    %21 = arith.addf %18, %20 : vector<8x128xf32>
    %c0_21 = arith.constant 0 : index
    %c0_22 = arith.constant 0 : index
    %22 = vector.load %arg10[%c0_21, %c0_22] : memref<128x128xf32, #tpu.memory_space<vmem>>, vector<128x128xf32>
    %cst_23 = arith.constant dense<0.000000e+00> : vector<8x128xf32>
    %23 = tpu.matmul %21, %22, %cst_23 {dimension_numbers = #tpu.dot_dimension_numbers<[1], [0], [0], [1], [0, 0, 1, 1], [], []>} : vector<8x128xf32>, vector<128x128xf32>, vector<8x128xf32> -> vector<8x128xf32>
    %c0_24 = arith.constant 0 : index
    %c0_25 = arith.constant 0 : index
    %24 = vector.load %arg11[%c0_24, %c0_25] : memref<32x128xf32, #tpu.memory_space<vmem>>, vector<32x128xf32>
    %cst_26 = arith.constant dense<0.000000e+00> : vector<8x128xf32>
    %25 = tpu.matmul %1, %24, %cst_26 {dimension_numbers = #tpu.dot_dimension_numbers<[1], [0], [0], [1], [0, 0, 1, 1], [], []>} : vector<8x32xf32>, vector<32x128xf32>, vector<8x128xf32> -> vector<8x128xf32>
    %26 = arith.addf %23, %25 : vector<8x128xf32>
    %c0_27 = arith.constant 0 : index
    %c0_28 = arith.constant 0 : index
    %27 = vector.load %arg12[%c0_27, %c0_28] : memref<1x128xf32, #tpu.memory_space<vmem>>, vector<1x128xf32>
    %28 = vector.broadcast %27 : vector<1x128xf32> to vector<8x128xf32>
    %29 = arith.addf %26, %28 : vector<8x128xf32>
    %30 = math.tanh %29 : vector<8x128xf32>
    %31 = vector.extract_strided_slice %30 {offsets = [0, 0], sizes = [8, 32], strides = [1, 1]} : vector<8x128xf32> to vector<8x32xf32>
    %cst_29 = arith.constant 5.000000e-01 : f32
    %32 = vector.broadcast %cst_29 : f32 to vector<8x32xf32>
    %33 = arith.mulf %32, %31 : vector<8x32xf32>
    %cst_30 = arith.constant 5.000000e-01 : f32
    %34 = vector.broadcast %cst_30 : f32 to vector<8x32xf32>
    %35 = arith.addf %33, %34 : vector<8x32xf32>
    %36 = vector.extract_strided_slice %30 {offsets = [0, 32], sizes = [8, 32], strides = [1, 1]} : vector<8x128xf32> to vector<8x32xf32>
    %cst_31 = arith.constant 5.000000e-01 : f32
    %37 = vector.broadcast %cst_31 : f32 to vector<8x32xf32>
    %38 = arith.mulf %37, %36 : vector<8x32xf32>
    %cst_32 = arith.constant 5.000000e-01 : f32
    %39 = vector.broadcast %cst_32 : f32 to vector<8x32xf32>
    %40 = arith.addf %38, %39 : vector<8x32xf32>
    %41 = vector.extract_strided_slice %30 {offsets = [0, 64], sizes = [8, 32], strides = [1, 1]} : vector<8x128xf32> to vector<8x32xf32>
    %42 = vector.extract_strided_slice %30 {offsets = [0, 96], sizes = [8, 32], strides = [1, 1]} : vector<8x128xf32> to vector<8x32xf32>
    %cst_33 = arith.constant 5.000000e-01 : f32
    %43 = vector.broadcast %cst_33 : f32 to vector<8x32xf32>
    %44 = arith.mulf %43, %42 : vector<8x32xf32>
    %cst_34 = arith.constant 5.000000e-01 : f32
    %45 = vector.broadcast %cst_34 : f32 to vector<8x32xf32>
    %46 = arith.addf %44, %45 : vector<8x32xf32>
    %47 = arith.mulf %40, %2 : vector<8x32xf32>
    %48 = arith.mulf %35, %41 : vector<8x32xf32>
    %49 = arith.addf %47, %48 : vector<8x32xf32>
    %50 = math.tanh %49 : vector<8x32xf32>
    %51 = arith.mulf %46, %50 : vector<8x32xf32>
    %c0_35 = arith.constant 0 : index
    %c0_36 = arith.constant 0 : index
    %52 = vector.load %arg13[%c0_35, %c0_36] : memref<8x32xf32, #tpu.memory_space<vmem>>, vector<8x32xf32>
    tpu.vector_store %arg13[%c0_35, %c0_36], %51 {strides = array<i32>} : memref<8x32xf32, #tpu.memory_space<vmem>>, vector<8x32xf32>,
    %c0_37 = arith.constant 0 : index
    %c0_38 = arith.constant 0 : index
    %53 = vector.load %arg14[%c0_37, %c0_38] : memref<8x32xf32, #tpu.memory_space<vmem>>, vector<8x32xf32>
    tpu.vector_store %arg14[%c0_37, %c0_38], %49 {strides = array<i32>} : memref<8x32xf32, #tpu.memory_space<vmem>>, vector<8x32xf32>,
    return
  }
  func.func @transform_0(%arg0: i32) -> (i32, i32) {
    %c0_i32 = arith.constant 0 : i32
    %c0_i32_0 = arith.constant 0 : i32
    return %arg0, %c0_i32 : i32, i32
  }
  func.func @transform_1(%arg0: i32) -> (i32, i32) {
    %c0_i32 = arith.constant 0 : i32
    %c0_i32_0 = arith.constant 0 : i32
    return %arg0, %c0_i32 : i32, i32
  }
  func.func @transform_2(%arg0: i32) -> (i32, i32) {
    %c0_i32 = arith.constant 0 : i32
    %c0_i32_0 = arith.constant 0 : i32
    return %arg0, %c0_i32 : i32, i32
  }
  func.func @transform_3(%arg0: i32) -> (i32, i32) {
    %c0_i32 = arith.constant 0 : i32
    %c0_i32_0 = arith.constant 0 : i32
    %c0_i32_1 = arith.constant 0 : i32
    return %c0_i32, %c0_i32_0 : i32, i32
  }
  func.func @transform_4(%arg0: i32) -> (i32, i32) {
    %c0_i32 = arith.constant 0 : i32
    %c0_i32_0 = arith.constant 0 : i32
    %c0_i32_1 = arith.constant 0 : i32
    return %c0_i32, %c0_i32_0 : i32, i32
  }
  func.func @transform_5(%arg0: i32) -> (i32, i32) {
    %c0_i32 = arith.constant 0 : i32
    %c0_i32_0 = arith.constant 0 : i32
    %c0_i32_1 = arith.constant 0 : i32
    return %c0_i32, %c0_i32_0 : i32, i32
  }
  func.func @transform_6(%arg0: i32) -> (i32, i32) {
    %c0_i32 = arith.constant 0 : i32
    %c0_i32_0 = arith.constant 0 : i32
    %c0_i32_1 = arith.constant 0 : i32
    return %c0_i32, %c0_i32_0 : i32, i32
  }
  func.func @transform_7(%arg0: i32) -> (i32, i32) {
    %c0_i32 = arith.constant 0 : i32
    %c0_i32_0 = arith.constant 0 : i32
    %c0_i32_1 = arith.constant 0 : i32
    return %c0_i32, %c0_i32_0 : i32, i32
  }
  func.func @transform_8(%arg0: i32) -> (i32, i32) {
    %c0_i32 = arith.constant 0 : i32
    %c0_i32_0 = arith.constant 0 : i32
    %c0_i32_1 = arith.constant 0 : i32
    return %c0_i32, %c0_i32_0 : i32, i32
  }
  func.func @transform_9(%arg0: i32) -> (i32, i32) {
    %c0_i32 = arith.constant 0 : i32
    %c0_i32_0 = arith.constant 0 : i32
    %c0_i32_1 = arith.constant 0 : i32
    return %c0_i32, %c0_i32_0 : i32, i32
  }
  func.func @transform_10(%arg0: i32) -> (i32, i32) {
    %c0_i32 = arith.constant 0 : i32
    %c0_i32_0 = arith.constant 0 : i32
    %c0_i32_1 = arith.constant 0 : i32
    return %c0_i32, %c0_i32_0 : i32, i32
  }
  func.func @transform_11(%arg0: i32) -> (i32, i32) {
    %c0_i32 = arith.constant 0 : i32
    %c0_i32_0 = arith.constant 0 : i32
    %c0_i32_1 = arith.constant 0 : i32
    return %c0_i32, %c0_i32_0 : i32, i32
  }
  func.func @transform_12(%arg0: i32) -> (i32, i32) {
    %c0_i32 = arith.constant 0 : i32
    %c0_i32_0 = arith.constant 0 : i32
    return %arg0, %c0_i32 : i32, i32
  }
  func.func @transform_13(%arg0: i32) -> (i32, i32) {
    %c0_i32 = arith.constant 0 : i32
    %c0_i32_0 = arith.constant 0 : i32
    return %arg0, %c0_i32 : i32, i32
  }
}

</mosaic_0001>

<llo_original>
// kernel: encoder_lstm_forward.1
$region0: #{encoder_lstm_forward.1}
  #allocation0 [shape = 'u32[]', space=smem, size = 0x4, offset = 0x4, fixed_abs, tag = 'smem constant byte address 0x4 - core index']
  #allocation1 [shape = 'u32[144,128]{1,0:T(1,128)}', space=vmem, size = 0x12000, scoped, tag = 'internal scratch']
  %s0 = inlined_call_operand.hbm [shape: f32[8,16], index: 0, kind: input, shape index: {}]
  %s1 = inlined_call_operand.hbm [shape: f32[8,32], index: 1, kind: input, shape index: {}]
  %s2 = inlined_call_operand.hbm [shape: f32[8,32], index: 2, kind: input, shape index: {}]
  %s3 = inlined_call_operand.hbm [shape: f32[16,128], index: 3, kind: input, shape index: {}]
  %s4 = inlined_call_operand.vmem [shape: f32[1,128], index: 4, kind: input, shape index: {}]
  %s5 = inlined_call_operand.hbm [shape: f32[128,128], index: 5, kind: input, shape index: {}]
  %s6 = inlined_call_operand.vmem [shape: f32[1,128], index: 6, kind: input, shape index: {}]
  %s7 = inlined_call_operand.hbm [shape: f32[128,128], index: 7, kind: input, shape index: {}]
  %s8 = inlined_call_operand.vmem [shape: f32[1,128], index: 8, kind: input, shape index: {}]
  %s9 = inlined_call_operand.hbm [shape: f32[128,128], index: 9, kind: input, shape index: {}]
  %s10 = inlined_call_operand.vmem [shape: f32[32,128], index: 10, kind: input, shape index: {}]
  %s11 = inlined_call_operand.vmem [shape: f32[1,128], index: 11, kind: input, shape index: {}]
  %s12 = inlined_call_operand.vmem [shape: f32[8,32], index: 12, kind: output, shape index: {0}]
  %s13 = inlined_call_operand.hbm [shape: f32[8,32], index: 13, kind: output, shape index: {1}]
  %14 = xla_tuple %s12, %s13
  %s15 = sld [smem:[#allocation0]]
  $region94: #{encoder_lstm_forward.1} parent=0
    _
  %s17 = ssub.s32 1, %s15
  %s18 = scalar_select 0, %s17, %s15
  $region1: #{encoder_lstm_forward.1} parent=0
    #allocation2 [shape = 'u8[4096]{0}', space=vmem, size = 0x1000, scoped, tag = 'input window, operand 0, single buffered']
    #allocation3 [shape = 's32[1]{0}', space=sflag, size = 0x4, scoped, tag = 'scoped memory for encoder_lstm_forward.1']
    #allocation4 [shape = 's32[1]{0}', space=sflag, size = 0x4, scoped, tag = 'scoped memory for encoder_lstm_forward.1']
    #allocation5 [shape = 'u8[4096]{0}', space=vmem, size = 0x1000, scoped, tag = 'input window, operand 1, single buffered']
    #allocation6 [shape = 's32[1]{0}', space=sflag, size = 0x4, scoped, tag = 'scoped memory for encoder_lstm_forward.1']
    #allocation7 [shape = 'u8[4096]{0}', space=vmem, size = 0x1000, scoped, tag = 'input window, operand 2, single buffered']
    #allocation8 [shape = 'u8[8192]{0}', space=vmem, size = 0x2000, scoped, tag = 'input window, operand 3, single buffered']
    #allocation9 [shape = 's32[1]{0}', space=sflag, size = 0x4, scoped, tag = 'scoped memory for encoder_lstm_forward.1']
    #allocation10 [shape = 'u8[65536]{0}', space=vmem, size = 0x10000, scoped, tag = 'input window, operand 5, single buffered']
    #allocation11 [shape = 'u8[65536]{0}', space=vmem, size = 0x10000, scoped, tag = 'input window, operand 7, single buffered']
    #allocation12 [shape = 's32[1]{0}', space=sflag, size = 0x4, scoped, tag = 'scoped memory for encoder_lstm_forward.1']
    #allocation13 [shape = 'u8[65536]{0}', space=vmem, size = 0x10000, scoped, tag = 'input window, operand 9, single buffered']
    #allocation14 [shape = 'u8[4096]{0}', space=vmem, size = 0x1000, scoped, tag = 'output window, operand 1, single buffered']
    %19 = vsyncpa [#allocation3], 0
    %20 = vsyncpa [#allocation6], 0
    %21 = vsyncpa [#allocation9], 0
    %22 = vsyncpa [#allocation12], 0
    %23 = vsyncpa [#allocation4], 0
    // Predicated region
    $region2: #{encoder_lstm_forward.1} parent=1 // pred_check
      _
    $region3: #{encoder_lstm_forward.1} parent=1 // pred_check_branch
      %25 = sbr.rel (0) target = $region5
    $region4: #{encoder_lstm_forward.1} parent=1 // pred_region
      %s27 = ssub.s32 128, 128
      %28 = vsyncadd [#allocation3], %s27
      %s30 = sshll.u32 [#allocation2], 4
      %s31 = int_to_ptr.vmem [resolvable:$true] %s30
      %33 = dma.hbm_to_vmem [thread:$0]  %s0, 128, %s31, [#allocation3]
    $region5: #{encoder_lstm_forward.1} parent=1 // pred_fallthru
      _
    // Predicated region
    $region6: #{encoder_lstm_forward.1} parent=1 // pred_check
      _
    $region7: #{encoder_lstm_forward.1} parent=1 // pred_check_branch
      %35 = sbr.rel (0) target = $region9
    $region8: #{encoder_lstm_forward.1} parent=1 // pred_region
      %s37 = ssub.s32 128, 128
      %38 = vsyncadd [#allocation6], %s37
      %s40 = sshll.u32 [#allocation5], 4
      %s41 = int_to_ptr.vmem [resolvable:$true] %s40
      %43 = dma.hbm_to_vmem [thread:$0]  %s1, 128, %s41, [#allocation6]
    $region9: #{encoder_lstm_forward.1} parent=1 // pred_fallthru
      _
    // Predicated region
    $region10: #{encoder_lstm_forward.1} parent=1 // pred_check
      _
    $region11: #{encoder_lstm_forward.1} parent=1 // pred_check_branch
      %45 = sbr.rel (0) target = $region13
    $region12: #{encoder_lstm_forward.1} parent=1 // pred_region
      %s47 = ssub.s32 128, 128
      %48 = vsyncadd [#allocation6], %s47
      %s50 = sshll.u32 [#allocation7], 4
      %s51 = int_to_ptr.vmem [resolvable:$true] %s50
      %53 = dma.hbm_to_vmem [thread:$0]  %s2, 128, %s51, [#allocation6]
    $region13: #{encoder_lstm_forward.1} parent=1 // pred_fallthru
      _
    // Predicated region
    $region14: #{encoder_lstm_forward.1} parent=1 // pred_check
      _
    $region15: #{encoder_lstm_forward.1} parent=1 // pred_check_branch
      %55 = sbr.rel (0) target = $region17
    $region16: #{encoder_lstm_forward.1} parent=1 // pred_region
      %s57 = ssub.s32 256, 256
      %58 = vsyncadd [#allocation9], %s57
      %s59 = sshll.u32 [#allocation8], 4
      %s60 = int_to_ptr.vmem [resolvable:$true] %s59
      %65 = dma.hbm_to_vmem [thread:$0]  %s3, 256, %s60, [#allocation9], 128, 128, 8
    $region17: #{encoder_lstm_forward.1} parent=1 // pred_fallthru
      _
    // Predicated region
    $region18: #{encoder_lstm_forward.1} parent=1 // pred_check
      _
    $region19: #{encoder_lstm_forward.1} parent=1 // pred_check_branch
      %67 = sbr.rel (0) target = $region21
    $region20: #{encoder_lstm_forward.1} parent=1 // pred_region
      _
    $region21: #{encoder_lstm_forward.1} parent=1 // pred_fallthru
      _
    // Predicated region
    $region22: #{encoder_lstm_forward.1} parent=1 // pred_check
      _
    $region23: #{encoder_lstm_forward.1} parent=1 // pred_check_branch
      %69 = sbr.rel (0) target = $region25
    $region24: #{encoder_lstm_forward.1} parent=1 // pred_region
      %s71 = ssub.s32 2048, 2048
      %72 = vsyncadd [#allocation9], %s71
      %s73 = sshll.u32 [#allocation10], 4
      %s74 = int_to_ptr.vmem [resolvable:$true] %s73
      %79 = dma.hbm_to_vmem [thread:$0]  %s5, 2048, %s74, [#allocation9], 128, 128, 8
    $region25: #{encoder_lstm_forward.1} parent=1 // pred_fallthru
      _
    // Predicated region
    $region26: #{encoder_lstm_forward.1} parent=1 // pred_check
      _
    $region27: #{encoder_lstm_forward.1} parent=1 // pred_check_branch
      %81 = sbr.rel (0) target = $region29
    $region28: #{encoder_lstm_forward.1} parent=1 // pred_region
      _
    $region29: #{encoder_lstm_forward.1} parent=1 // pred_fallthru
      _
    // Predicated region
    $region30: #{encoder_lstm_forward.1} parent=1 // pred_check
      _
    $region31: #{encoder_lstm_forward.1} parent=1 // pred_check_branch
      %83 = sbr.rel (0) target = $region33
    $region32: #{encoder_lstm_forward.1} parent=1 // pred_region
      %s85 = ssub.s32 2048, 2048
      %86 = vsyncadd [#allocation12], %s85
      %s87 = sshll.u32 [#allocation11], 4
      %s88 = int_to_ptr.vmem [resolvable:$true] %s87
      %93 = dma.hbm_to_vmem [thread:$0]  %s7, 2048, %s88, [#allocation12], 128, 128, 8
    $region33: #{encoder_lstm_forward.1} parent=1 // pred_fallthru
      _
    // Predicated region
    $region34: #{encoder_lstm_forward.1} parent=1 // pred_check
      _
    $region35: #{encoder_lstm_forward.1} parent=1 // pred_check_branch
      %95 = sbr.rel (0) target = $region37
    $region36: #{encoder_lstm_forward.1} parent=1 // pred_region
      _
    $region37: #{encoder_lstm_forward.1} parent=1 // pred_fallthru
      _
    // Predicated region
    $region38: #{encoder_lstm_forward.1} parent=1 // pred_check
      _
    $region39: #{encoder_lstm_forward.1} parent=1 // pred_check_branch
      %97 = sbr.rel (0) target = $region41
    $region40: #{encoder_lstm_forward.1} parent=1 // pred_region
      %s99 = ssub.s32 2048, 2048
      %100 = vsyncadd [#allocation12], %s99
      %s101 = sshll.u32 [#allocation13], 4
      %s102 = int_to_ptr.vmem [resolvable:$true] %s101
      %107 = dma.hbm_to_vmem [thread:$0]  %s9, 2048, %s102, [#allocation12], 128, 128, 8
    $region41: #{encoder_lstm_forward.1} parent=1 // pred_fallthru
      _
    // Predicated region
    $region42: #{encoder_lstm_forward.1} parent=1 // pred_check
      _
    $region43: #{encoder_lstm_forward.1} parent=1 // pred_check_branch
      %109 = sbr.rel (0) target = $region45
    $region44: #{encoder_lstm_forward.1} parent=1 // pred_region
      _
    $region45: #{encoder_lstm_forward.1} parent=1 // pred_fallthru
      _
    // Predicated region
    $region46: #{encoder_lstm_forward.1} parent=1 // pred_check
      _
    $region47: #{encoder_lstm_forward.1} parent=1 // pred_check_branch
      %111 = sbr.rel (0) target = $region49
    $region48: #{encoder_lstm_forward.1} parent=1 // pred_region
      _
    $region49: #{encoder_lstm_forward.1} parent=1 // pred_fallthru
      _
    // Predicated region
    $region50: #{encoder_lstm_forward.1} parent=1 // pred_check
      _
    $region51: #{encoder_lstm_forward.1} parent=1 // pred_check_branch
      %113 = sbr.rel (0) target = $region53
    $region52: #{encoder_lstm_forward.1} parent=1 // pred_region
      %114 = dma.done [#allocation3], 128
    $region53: #{encoder_lstm_forward.1} parent=1 // pred_fallthru
      _
    // Predicated region
    $region54: #{encoder_lstm_forward.1} parent=1 // pred_check
      _
    $region55: #{encoder_lstm_forward.1} parent=1 // pred_check_branch
      %116 = sbr.rel (0) target = $region57
    $region56: #{encoder_lstm_forward.1} parent=1 // pred_region
      %117 = dma.done [#allocation6], 128
    $region57: #{encoder_lstm_forward.1} parent=1 // pred_fallthru
      _
    // Predicated region
    $region58: #{encoder_lstm_forward.1} parent=1 // pred_check
      _
    $region59: #{encoder_lstm_forward.1} parent=1 // pred_check_branch
      %119 = sbr.rel (0) target = $region61
    $region60: #{encoder_lstm_forward.1} parent=1 // pred_region
      %120 = dma.done [#allocation6], 128
    $region61: #{encoder_lstm_forward.1} parent=1 // pred_fallthru
      _
    // Predicated region
    $region62: #{encoder_lstm_forward.1} parent=1 // pred_check
      _
    $region63: #{encoder_lstm_forward.1} parent=1 // pred_check_branch
      %122 = sbr.rel (0) target = $region65
    $region64: #{encoder_lstm_forward.1} parent=1 // pred_region
      %123 = dma.done [#allocation9], 256
    $region65: #{encoder_lstm_forward.1} parent=1 // pred_fallthru
      _
    // Predicated region
    $region66: #{encoder_lstm_forward.1} parent=1 // pred_check
      _
    $region67: #{encoder_lstm_forward.1} parent=1 // pred_check_branch
      %125 = sbr.rel (0) target = $region69
    $region68: #{encoder_lstm_forward.1} parent=1 // pred_region
      %126 = dma.done [#allocation9], 2048
    $region69: #{encoder_lstm_forward.1} parent=1 // pred_fallthru
      _
    // Predicated region
    $region70: #{encoder_lstm_forward.1} parent=1 // pred_check
      _
    $region71: #{encoder_lstm_forward.1} parent=1 // pred_check_branch
      %128 = sbr.rel (0) target = $region73
    $region72: #{encoder_lstm_forward.1} parent=1 // pred_region
      %129 = dma.done [#allocation12], 2048
    $region73: #{encoder_lstm_forward.1} parent=1 // pred_fallthru
      _
    // Predicated region
    $region74: #{encoder_lstm_forward.1} parent=1 // pred_check
      _
    $region75: #{encoder_lstm_forward.1} parent=1 // pred_check_branch
      %131 = sbr.rel (0) target = $region77
    $region76: #{encoder_lstm_forward.1} parent=1 // pred_region
      %132 = dma.done [#allocation12], 2048
    $region77: #{encoder_lstm_forward.1} parent=1 // pred_fallthru
      _
    %v133 = vld [vmem:[#allocation2] sm:$0xff]
    %v134 = vld [vmem:[#allocation5] sm:$0xff]
    %v135 = vld [vmem:[#allocation7] sm:$0xff]
    %v136 = vld [vmem:[#allocation8] sm:$0xff]
    %v137 = vld [vmem:[#allocation8 + $0x8] sm:$0xff]
    %v138 = vld [vmem:[%s4] sm:$0x1]
    %v140 = vlaneseq
    %v141 = vshrl.u32 %v140, 7
    %v142 = vsub.s32 0, %v141
    %v143 = vrot.slane %v138, %v142
    %vm145 = vcmask 130048
    %v147 = vsel %vm145, %v133, 0
    %149 = vmatprep.subr.mxu0 0.0
    %150 = vmatpush1.msra.mxu0 %v136
    %151 = vmatprep.subr.mxu0 0.0
    %152 = vmatpush1.msra.mxu0 %v137
    %153 = vmatprep.subr.mxu0 0.0
    %154 = vmatpush1.msra.mxu0 0.0
    %155 = vmatprep.subr.mxu0 0.0
    %156 = vmatpush1.msra.mxu0 0.0
    %157 = vmatprep.subr.mxu0 0.0
    %158 = vmatpush1.msra.mxu0 0.0
    %159 = vmatprep.subr.mxu0 0.0
    %160 = vmatpush1.msra.mxu0 0.0
    %161 = vmatprep.subr.mxu0 0.0
    %162 = vmatpush1.msra.mxu0 0.0
    %163 = vmatprep.subr.mxu0 0.0
    %164 = vmatpush1.msra.mxu0 0.0
    %165 = vmatprep.subr.mxu0 0.0
    %166 = vmatpush1.msra.mxu0 0.0
    %167 = vmatprep.subr.mxu0 0.0
    %168 = vmatpush1.msra.mxu0 0.0
    %169 = vmatprep.subr.mxu0 0.0
    %170 = vmatpush1.msra.mxu0 0.0
    %171 = vmatprep.subr.mxu0 0.0
    %172 = vmatpush1.msra.mxu0 0.0
    %173 = vmatprep.subr.mxu0 0.0
    %174 = vmatpush1.msra.mxu0 0.0
    %175 = vmatprep.subr.mxu0 0.0
    %176 = vmatpush1.msra.mxu0 0.0
    %177 = vmatprep.subr.mxu0 0.0
    %178 = vmatpush1.msra.mxu0 0.0
    %179 = vmatprep.subr.mxu0 0.0
    %180 = vmatpush1.msra.mxu0 0.0
    %181 = vmatprep.subr.mxu0 0.0
    %182 = vmatpush1.msra.mxu0 0.0
    %183 = vmatprep.subr.mxu0 0.0
    %184 = vmatpush1.msra.mxu0 0.0
    %185 = vmatprep.subr.mxu0 0.0
    %186 = vmatpush1.msra.mxu0 0.0
    %187 = vmatprep.subr.mxu0 0.0
    %188 = vmatpush1.msra.mxu0 0.0
    %189 = vmatprep.subr.mxu0 0.0
    %190 = vmatpush1.msra.mxu0 0.0
    %191 = vmatprep.subr.mxu0 0.0
    %192 = vmatpush1.msra.mxu0 0.0
    %193 = vmatprep.subr.mxu0 0.0
    %194 = vmatpush1.msra.mxu0 0.0
    %195 = vmatprep.subr.mxu0 0.0
    %196 = vmatpush1.msra.mxu0 0.0
    %197 = vmatprep.subr.mxu0 0.0
    %198 = vmatpush1.msra.mxu0 0.0
    %199 = vmatprep.subr.mxu0 0.0
    %200 = vmatpush1.msra.mxu0 0.0
    %201 = vmatprep.subr.mxu0 0.0
    %202 = vmatpush1.msra.mxu0 0.0
    %203 = vmatprep.subr.mxu0 0.0
    %204 = vmatpush1.msra.mxu0 0.0
    %205 = vmatprep.subr.mxu0 0.0
    %206 = vmatpush1.msra.mxu0 0.0
    %207 = vmatprep.subr.mxu0 0.0
    %208 = vmatpush1.msra.mxu0 0.0
    %209 = vmatprep.subr.mxu0 0.0
    %210 = vmatpush1.msra.mxu0 0.0
    %211 = vmatprep.subr.mxu0 0.0
    %212 = vmatpush1.msra.mxu0 0.0
    %213 = vmatprep.mubr.f32.mxu0 0.0
    %214 = vmatmul.mubr.f32.gmra.mrb[0].mxu0 %v147
    %v215 = vpop.f32.mrb[0].mxu0
    %v216 = vadd.f32 %v143, %v215
    %v217 = vpop.f32.mrb[0].mxu0
    %218 = vdwg.mxu0
    %v219 = vmax.f32 %v216, 0.0
    %v220 = vld [vmem:[#allocation10] sm:$0xff]
    %v221 = vld [vmem:[#allocation10 + $0x8] sm:$0xff]
    %v222 = vld [vmem:[#allocation10 + $0x10] sm:$0xff]
    %v223 = vld [vmem:[#allocation10 + $0x18] sm:$0xff]
    %v224 = vld [vmem:[#allocation10 + $0x20] sm:$0xff]
    %v225 = vld [vmem:[#allocation10 + $0x28] sm:$0xff]
    %v226 = vld [vmem:[#allocation10 + $0x30] sm:$0xff]
    %v227 = vld [vmem:[#allocation10 + $0x38] sm:$0xff]
    %v228 = vld [vmem:[#allocation10 + $0x40] sm:$0xff]
    %v229 = vld [vmem:[#allocation10 + $0x48] sm:$0xff]
    %v230 = vld [vmem:[#allocation10 + $0x50] sm:$0xff]
    %v231 = vld [vmem:[#allocation10 + $0x58] sm:$0xff]
    %v232 = vld [vmem:[#allocation10 + $0x60] sm:$0xff]
    %v233 = vld [vmem:[#allocation10 + $0x68] sm:$0xff]
    %v234 = vld [vmem:[#allocation10 + $0x70] sm:$0xff]
    %v235 = vld [vmem:[#allocation10 + $0x78] sm:$0xff]
    %v236 = vld [vmem:[%s6] sm:$0x1]
    %v238 = vlaneseq
    %v239 = vshrl.u32 %v238, 7
    %v240 = vsub.s32 0, %v239
    %v241 = vrot.slane %v236, %v240
    %243 = vmatprep.subr.mxu0 0.0
    %244 = vmatpush1.msra.mxu0 %v220
    %245 = vmatprep.subr.mxu0 0.0
    %246 = vmatpush1.msra.mxu0 %v221
    %247 = vmatprep.subr.mxu0 0.0
    %248 = vmatpush1.msra.mxu0 %v222
    %249 = vmatprep.subr.mxu0 0.0
    %250 = vmatpush1.msra.mxu0 %v223
    %251 = vmatprep.subr.mxu0 0.0
    %252 = vmatpush1.msra.mxu0 %v224
    %253 = vmatprep.subr.mxu0 0.0
    %254 = vmatpush1.msra.mxu0 %v225
    %255 = vmatprep.subr.mxu0 0.0
    %256 = vmatpush1.msra.mxu0 %v226
    %257 = vmatprep.subr.mxu0 0.0
    %258 = vmatpush1.msra.mxu0 %v227
    %259 = vmatprep.subr.mxu0 0.0
    %260 = vmatpush1.msra.mxu0 %v228
    %261 = vmatprep.subr.mxu0 0.0
    %262 = vmatpush1.msra.mxu0 %v229
    %263 = vmatprep.subr.mxu0 0.0
    %264 = vmatpush1.msra.mxu0 %v230
    %265 = vmatprep.subr.mxu0 0.0
    %266 = vmatpush1.msra.mxu0 %v231
    %267 = vmatprep.subr.mxu0 0.0
    %268 = vmatpush1.msra.mxu0 %v232
    %269 = vmatprep.subr.mxu0 0.0
    %270 = vmatpush1.msra.mxu0 %v233
    %271 = vmatprep.subr.mxu0 0.0
    %272 = vmatpush1.msra.mxu0 %v234
    %273 = vmatprep.subr.mxu0 0.0
    %274 = vmatpush1.msra.mxu0 %v235
    %275 = vmatprep.subr.mxu0 0.0
    %276 = vmatpush1.msra.mxu0 0.0
    %277 = vmatprep.subr.mxu0 0.0
    %278 = vmatpush1.msra.mxu0 0.0
    %279 = vmatprep.subr.mxu0 0.0
    %280 = vmatpush1.msra.mxu0 0.0
    %281 = vmatprep.subr.mxu0 0.0
    %282 = vmatpush1.msra.mxu0 0.0
    %283 = vmatprep.subr.mxu0 0.0
    %284 = vmatpush1.msra.mxu0 0.0
    %285 = vmatprep.subr.mxu0 0.0
    %286 = vmatpush1.msra.mxu0 0.0
    %287 = vmatprep.subr.mxu0 0.0
    %288 = vmatpush1.msra.mxu0 0.0
    %289 = vmatprep.subr.mxu0 0.0
    %290 = vmatpush1.msra.mxu0 0.0
    %291 = vmatprep.subr.mxu0 0.0
    %292 = vmatpush1.msra.mxu0 0.0
    %293 = vmatprep.subr.mxu0 0.0
    %294 = vmatpush1.msra.mxu0 0.0
    %295 = vmatprep.subr.mxu0 0.0
    %296 = vmatpush1.msra.mxu0 0.0
    %297 = vmatprep.subr.mxu0 0.0
    %298 = vmatpush1.msra.mxu0 0.0
    %299 = vmatprep.subr.mxu0 0.0
    %300 = vmatpush1.msra.mxu0 0.0
    %301 = vmatprep.subr.mxu0 0.0
    %302 = vmatpush1.msra.mxu0 0.0
    %303 = vmatprep.subr.mxu0 0.0
    %304 = vmatpush1.msra.mxu0 0.0
    %305 = vmatprep.subr.mxu0 0.0
    %306 = vmatpush1.msra.mxu0 0.0
    %307 = vmatprep.mubr.f32.mxu0 0.0
    %308 = vmatmul.mubr.f32.gmra.mrb[0].mxu0 %v219
    %v309 = vpop.f32.mrb[0].mxu0
    %v310 = vadd.f32 %v241, %v309
    %v311 = vpop.f32.mrb[0].mxu0
    %312 = vdwg.mxu0
    %v313 = vmax.f32 %v310, 0.0
    %v314 = vld [vmem:[#allocation11] sm:$0xff]
    %v315 = vld [vmem:[#allocation11 + $0x8] sm:$0xff]
    %v316 = vld [vmem:[#allocation11 + $0x10] sm:$0xff]
    %v317 = vld [vmem:[#allocation11 + $0x18] sm:$0xff]
    %v318 = vld [vmem:[#allocation11 + $0x20] sm:$0xff]
    %v319 = vld [vmem:[#allocation11 + $0x28] sm:$0xff]
    %v320 = vld [vmem:[#allocation11 + $0x30] sm:$0xff]
    %v321 = vld [vmem:[#allocation11 + $0x38] sm:$0xff]
    %v322 = vld [vmem:[#allocation11 + $0x40] sm:$0xff]
    %v323 = vld [vmem:[#allocation11 + $0x48] sm:$0xff]
    %v324 = vld [vmem:[#allocation11 + $0x50] sm:$0xff]
    %v325 = vld [vmem:[#allocation11 + $0x58] sm:$0xff]
    %v326 = vld [vmem:[#allocation11 + $0x60] sm:$0xff]
    %v327 = vld [vmem:[#allocation11 + $0x68] sm:$0xff]
    %v328 = vld [vmem:[#allocation11 + $0x70] sm:$0xff]
    %v329 = vld [vmem:[#allocation11 + $0x78] sm:$0xff]
    %v330 = vld [vmem:[%s8] sm:$0x1]
    %v332 = vlaneseq
    %v333 = vshrl.u32 %v332, 7
    %v334 = vsub.s32 0, %v333
    %v335 = vrot.slane %v330, %v334
    %337 = vmatprep.subr.mxu0 0.0
    %338 = vmatpush1.msra.mxu0 %v314
    %339 = vmatprep.subr.mxu0 0.0
    %340 = vmatpush1.msra.mxu0 %v315
    %341 = vmatprep.subr.mxu0 0.0
    %342 = vmatpush1.msra.mxu0 %v316
    %343 = vmatprep.subr.mxu0 0.0
    %344 = vmatpush1.msra.mxu0 %v317
    %345 = vmatprep.subr.mxu0 0.0
    %346 = vmatpush1.msra.mxu0 %v318
    %347 = vmatprep.subr.mxu0 0.0
    %348 = vmatpush1.msra.mxu0 %v319
    %349 = vmatprep.subr.mxu0 0.0
    %350 = vmatpush1.msra.mxu0 %v320
    %351 = vmatprep.subr.mxu0 0.0
    %352 = vmatpush1.msra.mxu0 %v321
    %353 = vmatprep.subr.mxu0 0.0
    %354 = vmatpush1.msra.mxu0 %v322
    %355 = vmatprep.subr.mxu0 0.0
    %356 = vmatpush1.msra.mxu0 %v323
    %357 = vmatprep.subr.mxu0 0.0
    %358 = vmatpush1.msra.mxu0 %v324
    %359 = vmatprep.subr.mxu0 0.0
    %360 = vmatpush1.msra.mxu0 %v325
    %361 = vmatprep.subr.mxu0 0.0
    %362 = vmatpush1.msra.mxu0 %v326
    %363 = vmatprep.subr.mxu0 0.0
    %364 = vmatpush1.msra.mxu0 %v327
    %365 = vmatprep.subr.mxu0 0.0
    %366 = vmatpush1.msra.mxu0 %v328
    %367 = vmatprep.subr.mxu0 0.0
    %368 = vmatpush1.msra.mxu0 %v329
    %369 = vmatprep.subr.mxu0 0.0
    %370 = vmatpush1.msra.mxu0 0.0
    %371 = vmatprep.subr.mxu0 0.0
    %372 = vmatpush1.msra.mxu0 0.0
    %373 = vmatprep.subr.mxu0 0.0
    %374 = vmatpush1.msra.mxu0 0.0
    %375 = vmatprep.subr.mxu0 0.0
    %376 = vmatpush1.msra.mxu0 0.0
    %377 = vmatprep.subr.mxu0 0.0
    %378 = vmatpush1.msra.mxu0 0.0
    %379 = vmatprep.subr.mxu0 0.0
    %380 = vmatpush1.msra.mxu0 0.0
    %381 = vmatprep.subr.mxu0 0.0
    %382 = vmatpush1.msra.mxu0 0.0
    %383 = vmatprep.subr.mxu0 0.0
    %384 = vmatpush1.msra.mxu0 0.0
    %385 = vmatprep.subr.mxu0 0.0
    %386 = vmatpush1.msra.mxu0 0.0
    %387 = vmatprep.subr.mxu0 0.0
    %388 = vmatpush1.msra.mxu0 0.0
    %389 = vmatprep.subr.mxu0 0.0
    %390 = vmatpush1.msra.mxu0 0.0
    %391 = vmatprep.subr.mxu0 0.0
    %392 = vmatpush1.msra.mxu0 0.0
    %393 = vmatprep.subr.mxu0 0.0
    %394 = vmatpush1.msra.mxu0 0.0
    %395 = vmatprep.subr.mxu0 0.0
    %396 = vmatpush1.msra.mxu0 0.0
    %397 = vmatprep.subr.mxu0 0.0
    %398 = vmatpush1.msra.mxu0 0.0
    %399 = vmatprep.subr.mxu0 0.0
    %400 = vmatpush1.msra.mxu0 0.0
    %401 = vmatprep.mubr.f32.mxu0 0.0
    %402 = vmatmul.mubr.f32.gmra.mrb[0].mxu0 %v313
    %v403 = vpop.f32.mrb[0].mxu0
    %v404 = vadd.f32 %v335, %v403
    %v405 = vpop.f32.mrb[0].mxu0
    %406 = vdwg.mxu0
    %v407 = vld [vmem:[#allocation13] sm:$0xff]
    %v408 = vld [vmem:[#allocation13 + $0x8] sm:$0xff]
    %v409 = vld [vmem:[#allocation13 + $0x10] sm:$0xff]
    %v410 = vld [vmem:[#allocation13 + $0x18] sm:$0xff]
    %v411 = vld [vmem:[#allocation13 + $0x20] sm:$0xff]
    %v412 = vld [vmem:[#allocation13 + $0x28] sm:$0xff]
    %v413 = vld [vmem:[#allocation13 + $0x30] sm:$0xff]
    %v414 = vld [vmem:[#allocation13 + $0x38] sm:$0xff]
    %v415 = vld [vmem:[#allocation13 + $0x40] sm:$0xff]
    %v416 = vld [vmem:[#allocation13 + $0x48] sm:$0xff]
    %v417 = vld [vmem:[#allocation13 + $0x50] sm:$0xff]
    %v418 = vld [vmem:[#allocation13 + $0x58] sm:$0xff]
    %v419 = vld [vmem:[#allocation13 + $0x60] sm:$0xff]
    %v420 = vld [vmem:[#allocation13 + $0x68] sm:$0xff]
    %v421 = vld [vmem:[#allocation13 + $0x70] sm:$0xff]
    %v422 = vld [vmem:[#allocation13 + $0x78] sm:$0xff]
    %v423 = vld [vmem:[%s10] sm:$0xff]
    %v424 = vld [vmem:[%s10 + $0x8] sm:$0xff]
    %v425 = vld [vmem:[%s10 + $0x10] sm:$0xff]
    %v426 = vld [vmem:[%s10 + $0x18] sm:$0xff]
    %vm427 = vcmask 261120
    %v429 = vsel %vm427, %v134, 0
    %431 = vmatprep.subr.mxu0 0.0
    %432 = vmatpush1.msra.mxu0 %v423
    %433 = vmatprep.subr.mxu0 0.0
    %434 = vmatpush1.msra.mxu0 %v424
    %435 = vmatprep.subr.mxu0 0.0
    %436 = vmatpush1.msra.mxu0 %v425
    %437 = vmatprep.subr.mxu0 0.0
    %438 = vmatpush1.msra.mxu0 %v426
    %439 = vmatprep.subr.mxu0 0.0
    %440 = vmatpush1.msra.mxu0 0.0
    %441 = vmatprep.subr.mxu0 0.0
    %442 = vmatpush1.msra.mxu0 0.0
    %443 = vmatprep.subr.mxu0 0.0
    %444 = vmatpush1.msra.mxu0 0.0
    %445 = vmatprep.subr.mxu0 0.0
    %446 = vmatpush1.msra.mxu0 0.0
    %447 = vmatprep.subr.mxu0 0.0
    %448 = vmatpush1.msra.mxu0 0.0
    %449 = vmatprep.subr.mxu0 0.0
    %450 = vmatpush1.msra.mxu0 0.0
    %451 = vmatprep.subr.mxu0 0.0
    %452 = vmatpush1.msra.mxu0 0.0
    %453 = vmatprep.subr.mxu0 0.0
    %454 = vmatpush1.msra.mxu0 0.0
    %455 = vmatprep.subr.mxu0 0.0
    %456 = vmatpush1.msra.mxu0 0.0
    %457 = vmatprep.subr.mxu0 0.0
    %458 = vmatpush1.msra.mxu0 0.0
    %459 = vmatprep.subr.mxu0 0.0
    %460 = vmatpush1.msra.mxu0 0.0
    %461 = vmatprep.subr.mxu0 0.0
    %462 = vmatpush1.msra.mxu0 0.0
    %463 = vmatprep.subr.mxu0 0.0
    %464 = vmatpush1.msra.mxu0 0.0
    %465 = vmatprep.subr.mxu0 0.0
    %466 = vmatpush1.msra.mxu0 0.0
    %467 = vmatprep.subr.mxu0 0.0
    %468 = vmatpush1.msra.mxu0 0.0
    %469 = vmatprep.subr.mxu0 0.0
    %470 = vmatpush1.msra.mxu0 0.0
    %471 = vmatprep.subr.mxu0 0.0
    %472 = vmatpush1.msra.mxu0 0.0
    %473 = vmatprep.subr.mxu0 0.0
    %474 = vmatpush1.msra.mxu0 0.0
    %475 = vmatprep.subr.mxu0 0.0
    %476 = vmatpush1.msra.mxu0 0.0
    %477 = vmatprep.subr.mxu0 0.0
    %478 = vmatpush1.msra.mxu0 0.0
    %479 = vmatprep.subr.mxu0 0.0
    %480 = vmatpush1.msra.mxu0 0.0
    %481 = vmatprep.subr.mxu0 0.0
    %482 = vmatpush1.msra.mxu0 0.0
    %483 = vmatprep.subr.mxu0 0.0
    %484 = vmatpush1.msra.mxu0 0.0
    %485 = vmatprep.subr.mxu0 0.0
    %486 = vmatpush1.msra.mxu0 0.0
    %487 = vmatprep.subr.mxu0 0.0
    %488 = vmatpush1.msra.mxu0 0.0
    %489 = vmatprep.subr.mxu0 0.0
    %490 = vmatpush1.msra.mxu0 0.0
    %491 = vmatprep.subr.mxu0 0.0
    %492 = vmatpush1.msra.mxu0 0.0
    %493 = vmatprep.subr.mxu0 0.0
    %494 = vmatpush1.msra.mxu0 0.0
    %495 = vmatprep.mubr.f32.mxu0 0.0
    %496 = vmatmul.mubr.f32.gmra.mrb[0].mxu0 %v429
    %v497 = vpop.f32.mrb[0].mxu0
    %v498 = vadd.f32 0.0, %v497
    %v499 = vpop.f32.mrb[0].mxu0
    %500 = vdwg.mxu0
    %501 = vmatprep.subr.mxu0 0.0
    %502 = vmatpush1.msra.mxu0 %v407
    %503 = vmatprep.subr.mxu0 0.0
    %504 = vmatpush1.msra.mxu0 %v408
    %505 = vmatprep.subr.mxu0 0.0
    %506 = vmatpush1.msra.mxu0 %v409
    %507 = vmatprep.subr.mxu0 0.0
    %508 = vmatpush1.msra.mxu0 %v410
    %509 = vmatprep.subr.mxu0 0.0
    %510 = vmatpush1.msra.mxu0 %v411
    %511 = vmatprep.subr.mxu0 0.0
    %512 = vmatpush1.msra.mxu0 %v412
    %513 = vmatprep.subr.mxu0 0.0
    %514 = vmatpush1.msra.mxu0 %v413
    %515 = vmatprep.subr.mxu0 0.0
    %516 = vmatpush1.msra.mxu0 %v414
    %517 = vmatprep.subr.mxu0 0.0
    %518 = vmatpush1.msra.mxu0 %v415
    %519 = vmatprep.subr.mxu0 0.0
    %520 = vmatpush1.msra.mxu0 %v416
    %521 = vmatprep.subr.mxu0 0.0
    %522 = vmatpush1.msra.mxu0 %v417
    %523 = vmatprep.subr.mxu0 0.0
    %524 = vmatpush1.msra.mxu0 %v418
    %525 = vmatprep.subr.mxu0 0.0
    %526 = vmatpush1.msra.mxu0 %v419
    %527 = vmatprep.subr.mxu0 0.0
    %528 = vmatpush1.msra.mxu0 %v420
    %529 = vmatprep.subr.mxu0 0.0
    %530 = vmatpush1.msra.mxu0 %v421
    %531 = vmatprep.subr.mxu0 0.0
    %532 = vmatpush1.msra.mxu0 %v422
    %533 = vmatprep.subr.mxu0 0.0
    %534 = vmatpush1.msra.mxu0 0.0
    %535 = vmatprep.subr.mxu0 0.0
    %536 = vmatpush1.msra.mxu0 0.0
    %537 = vmatprep.subr.mxu0 0.0
    %538 = vmatpush1.msra.mxu0 0.0
    %539 = vmatprep.subr.mxu0 0.0
    %540 = vmatpush1.msra.mxu0 0.0
    %541 = vmatprep.subr.mxu0 0.0
    %542 = vmatpush1.msra.mxu0 0.0
    %543 = vmatprep.subr.mxu0 0.0
    %544 = vmatpush1.msra.mxu0 0.0
    %545 = vmatprep.subr.mxu0 0.0
    %546 = vmatpush1.msra.mxu0 0.0
    %547 = vmatprep.subr.mxu0 0.0
    %548 = vmatpush1.msra.mxu0 0.0
    %549 = vmatprep.subr.mxu0 0.0
    %550 = vmatpush1.msra.mxu0 0.0
    %551 = vmatprep.subr.mxu0 0.0
    %552 = vmatpush1.msra.mxu0 0.0
    %553 = vmatprep.subr.mxu0 0.0
    %554 = vmatpush1.msra.mxu0 0.0
    %555 = vmatprep.subr.mxu0 0.0
    %556 = vmatpush1.msra.mxu0 0.0
    %557 = vmatprep.subr.mxu0 0.0
    %558 = vmatpush1.msra.mxu0 0.0
    %559 = vmatprep.subr.mxu0 0.0
    %560 = vmatpush1.msra.mxu0 0.0
    %561 = vmatprep.subr.mxu0 0.0
    %562 = vmatpush1.msra.mxu0 0.0
    %563 = vmatprep.subr.mxu0 0.0
    %564 = vmatpush1.msra.mxu0 0.0
    %565 = vmatprep.mubr.f32.mxu0 0.0
    %566 = vmatmul.mubr.f32.gmra.mrb[0].mxu0 %v404
    %v567 = vpop.f32.mrb[0].mxu0
    %v568 = vadd.f32 %v498, %v567
    %v569 = vpop.f32.mrb[0].mxu0
    %570 = vdwg.mxu0
    %v571 = vld [vmem:[%s11] sm:$0x1]
    %v573 = vlaneseq
    %v574 = vshrl.u32 %v573, 7
    %v575 = vsub.s32 0, %v574
    %v576 = vrot.slane %v571, %v575
    %v578 = vadd.f32 %v568, %v576
    %v579 = vtanh.pop %v578
    %v580 = vmul.f32 %v579, 0.5
    %v581 = vadd.f32 %v580, 0.5
    %583 = vrot.lane.b32.xlu0 %v135, 32
    %v584 = vpop.permute.xlu0 %583
    %v586 = vmul.f32 %v581, %v584
    %588 = vrot.lane.b32.xlu0 %v579, 64
    %v589 = vpop.permute.xlu0 %588
    %v591 = vmul.f32 %v581, %v589
    %593 = vrot.lane.b32.xlu0 %v591, 32
    %v594 = vpop.permute.xlu0 %593
    %v596 = vadd.f32 %v586, %v594
    %v597 = vtanh.pop %v596
    %599 = vrot.lane.b32.xlu0 %v597, 64
    %v600 = vpop.permute.xlu0 %599
    %v602 = vmul.f32 %v581, %v600
    %604 = vrot.lane.b32.xlu0 %v602, 32
    %v605 = vpop.permute.xlu0 %604
    %607 = vst.msk [vmem:[%s12] sm:$0xff] %vm427, %v605
    %609 = vrot.lane.b32.xlu0 %v596, 96
    %v610 = vpop.permute.xlu0 %609
    %612 = vst.msk [vmem:[#allocation14] sm:$0xff] %vm427, %v610
    // Predicated region
    $region78: #{encoder_lstm_forward.1} parent=1 // pred_check
      _
    $region79: #{encoder_lstm_forward.1} parent=1 // pred_check_branch
      %614 = sbr.rel (0) target = $region81
    $region80: #{encoder_lstm_forward.1} parent=1 // pred_region
      _
    $region81: #{encoder_lstm_forward.1} parent=1 // pred_fallthru
      _
    // Predicated region
    $region82: #{encoder_lstm_forward.1} parent=1 // pred_check
      _
    $region83: #{encoder_lstm_forward.1} parent=1 // pred_check_branch
      %616 = sbr.rel (0) target = $region85
    $region84: #{encoder_lstm_forward.1} parent=1 // pred_region
      %s618 = ssub.s32 128, 128
      %619 = vsyncadd [#allocation4], %s618
      %s621 = sshll.u32 [#allocation14], 4
      %s622 = int_to_ptr.vmem [resolvable:$true] %s621
      %624 = dma.vmem_to_hbm [thread:$0]  %s622, 128, %s13, [#allocation4]
    $region85: #{encoder_lstm_forward.1} parent=1 // pred_fallthru
      _
    // Predicated region
    $region86: #{encoder_lstm_forward.1} parent=1 // pred_check
      _
    $region87: #{encoder_lstm_forward.1} parent=1 // pred_check_branch
      %626 = sbr.rel (0) target = $region89
    $region88: #{encoder_lstm_forward.1} parent=1 // pred_region
      _
    $region89: #{encoder_lstm_forward.1} parent=1 // pred_fallthru
      _
    // Predicated region
    $region90: #{encoder_lstm_forward.1} parent=1 // pred_check
      _
    $region91: #{encoder_lstm_forward.1} parent=1 // pred_check_branch
      %628 = sbr.rel (0) target = $region93
    $region92: #{encoder_lstm_forward.1} parent=1 // pred_region
      %629 = dma.done [#allocation4], 128
    $region93: #{encoder_lstm_forward.1} parent=1 // pred_fallthru
      _
    %630 = vsyncpa [#allocation3], 1
    %631 = vsyncpa [#allocation6], 1
    %632 = vsyncpa [#allocation9], 1
    %633 = vsyncpa [#allocation12], 1
    %634 = vsyncpa [#allocation4], 1

</llo_original>
